<compile_context>
chip_gen: v7x
topology: tpu7x:2x2x1
jax: 0.10.0
libtpu: 0.0.40
codegen_flags: <defaults>
</compile_context>

<pallas_src>
import jax
import jax.numpy as jnp
import numpy as np
from jax.experimental import pallas as pl
from jax.experimental.pallas import tpu as pltpu

batch_size = 1
hidden_size = 5
input_size = 5
num_classes = 5
num_layers = 1
sequence_length = 1

PAD_ROWS = 8                       # sublane tile
PACK_COLS = 32                     # packed-operand lanes / weight contraction rows
OUT_COLS = 128                     # result lanes (keep lane-dense, unmasked stores)

# Lane layout of the packed operand / row layout of the combined weight:
#   lanes [0, hidden_size)             -> hidden state h_{t-1}
#   lanes [X_OFF, X_OFF + input_size)  -> input x_t
#   lane  BIAS_LANE                    -> constant 1.0 (folds the bias add)
X_OFF = 8
BIAS_LANE = X_OFF + input_size     # = 13, contiguous with x for one-shot packing

# Static invariants the augmented-matrix trick relies on (tanh(0)=0 keeps the
# padded rows/lanes exactly zero across steps).
assert batch_size <= PAD_ROWS
assert hidden_size <= X_OFF
assert BIAS_LANE < PACK_COLS
assert hidden_size <= OUT_COLS
assert num_classes == hidden_size
assert num_layers == 1


def fused_rnn_kernel(x_ref, w_ref, out_ref):
    """One fused kernel for the whole sequence.

    Per step a single (8,32)x(32,128) MXU matmul computes
        x_t @ W_ih^T + h_{t-1} @ W_hh^T + (b_ih + b_hh)
    because x, h and a constant-1 lane share one packed operand and
    W_ih^T / W_hh^T / bias are stacked into one weight tile.  The hidden
    state never leaves vregs between steps.  h0 is pre-folded into x_ref[0]
    by the wrapper, so step 0 is a single dot.
    """
    w = w_ref[...]                                    # (PACK_COLS, OUT_COLS)
    h = jnp.tanh(jnp.dot(x_ref[0], w, preferred_element_type=jnp.float32))
    out_ref[0] = h
    # TODO(synk): for long sequences switch this static unroll to lax.fori_loop
    # and add a time-axis grid; trivial at sequence_length == 1.
    for t in range(1, sequence_length):
        packed = h[:, :PACK_COLS] + x_ref[t]          # h lanes [0,hidden), x/bias from x_ref
        h = jnp.tanh(jnp.dot(packed, w, preferred_element_type=jnp.float32))
        out_ref[t] = h


def prepare_combined_weight(w_ih, w_hh, b_ih, b_hh):
    """One-time (hoisted) packing of loop-invariant params into a single
    (32,128) weight tile (augmented-matrix trick for the bias)."""
    w = jnp.zeros((PACK_COLS, OUT_COLS), jnp.float32)
    w = w.at[0:hidden_size, 0:hidden_size].set(w_hh.T.astype(jnp.float32))
    w = w.at[X_OFF:X_OFF + input_size, 0:hidden_size].set(w_ih.T.astype(jnp.float32))
    w = w.at[BIAS_LANE, 0:hidden_size].set((b_ih + b_hh).astype(jnp.float32))
    return w


@jax.jit
def model_forward(w_combined, hidden, x):
    """Matches Model.forward(hidden, x) -> (hidden_new, out.view(-1, num_classes))."""
    x = x.reshape(batch_size, sequence_length, input_size).astype(jnp.float32)
    x_sb = jnp.transpose(x, (1, 0, 2))                # (seq, batch, input)
    h0 = hidden[0].astype(jnp.float32)                # (batch, hidden) — single layer

    # Pack [h0 (step 0 only) | pad | x_t | 1 | pad] into (seq, 8, PACK_COLS)
    # with one concat + two pads (no per-lane scatters).
    h_lanes = jnp.pad(h0[None],                       # (1, batch, hidden)
                      ((0, sequence_length - 1), (0, 0), (0, X_OFF - hidden_size)))
    ones = jnp.ones((sequence_length, batch_size, 1), jnp.float32)
    feat = jnp.concatenate([h_lanes, x_sb, ones], axis=-1)   # (seq, batch, BIAS_LANE+1)
    x_p = jnp.pad(feat, ((0, 0),
                         (0, PAD_ROWS - batch_size),
                         (0, PACK_COLS - (BIAS_LANE + 1))))  # (seq, 8, PACK_COLS)

    vmem = pl.BlockSpec(memory_space=pltpu.MemorySpace.VMEM)
    out_p = pl.pallas_call(
        fused_rnn_kernel,
        out_shape=jax.ShapeDtypeStruct(
            (sequence_length, PAD_ROWS, OUT_COLS), jnp.float32),
        in_specs=[vmem, vmem],
        out_specs=vmem,
    )(x_p, w_combined)

    out = jnp.transpose(out_p[:, :batch_size, :hidden_size], (1, 0, 2))  # (b, s, h)
    h_last = out_p[sequence_length - 1, :batch_size, :hidden_size]       # (batch, hidden)
    hidden_new = h_last[None, :, :]                                      # (layers, b, h)
    return hidden_new, out.reshape(-1, num_classes)


def model_forward_ref(params, hidden, x):
    """Pure-JAX reference of the same forward pass (sanity check)."""
    x = x.reshape(batch_size, sequence_length, input_size)
    h = hidden[0]
    outs = []
    for t in range(sequence_length):
        h = jnp.tanh(
            x[:, t, :] @ params["w_ih"].T
            + h @ params["w_hh"].T
            + params["b_ih"]
            + params["b_hh"]
        )
        outs.append(h)
    out = jnp.stack(outs, axis=1)
    return h[None, :, :], out.reshape(-1, num_classes)


if __name__ == "__main__":
    key = jax.random.PRNGKey(0)
    kx, kw1, kw2, kb1, kb2 = jax.random.split(key, 5)

    # Deterministic param init mirroring nn.RNN's uniform(-1/sqrt(H), 1/sqrt(H)).
    k = 1.0 / float(np.sqrt(hidden_size))
    params = {
        "w_ih": jax.random.uniform(kw1, (hidden_size, input_size), jnp.float32, -k, k),
        "w_hh": jax.random.uniform(kw2, (hidden_size, hidden_size), jnp.float32, -k, k),
        "b_ih": jax.random.uniform(kb1, (hidden_size,), jnp.float32, -k, k),
        "b_hh": jax.random.uniform(kb2, (hidden_size,), jnp.float32, -k, k),
    }

    # Loop-invariant weight packing done exactly once.
    w_combined = prepare_combined_weight(
        params["w_ih"], params["w_hh"], params["b_ih"], params["b_hh"])

    x = jax.random.normal(kx, (batch_size, sequence_length, input_size), jnp.float32)
    hidden0 = jnp.zeros((num_layers, batch_size, hidden_size), jnp.float32)  # init_hidden()

    hidden_new, out = model_forward(w_combined, hidden0, x)
    jax.block_until_ready((hidden_new, out))

    hidden_ref, out_ref = model_forward_ref(params, hidden0, x)
    np.testing.assert_allclose(np.asarray(hidden_new), np.asarray(hidden_ref),
                               atol=1e-5, rtol=1e-5)
    np.testing.assert_allclose(np.asarray(out), np.asarray(out_ref),
                               atol=1e-5, rtol=1e-5)

    assert hidden_new.shape == (num_layers, batch_size, hidden_size)
    assert out.shape == (batch_size * sequence_length, num_classes)

    print("KERNEL_OK")
</pallas_src>

<mosaic_0001>
module attributes {stable_mosaic.version = 11 : i64} {
  func.func @fused_rnn_kernel(%arg0: memref<1x8x32xf32, #tpu.memory_space<vmem>>, %arg1: memref<32x128xf32, #tpu.memory_space<vmem>>, %arg2: memref<1x8x128xf32, #tpu.memory_space<vmem>>) attributes {dimension_semantics = [], scalar_prefetch = 0 : i64, scratch_operands = 0 : i64, tpu.core_type = #tpu.core_type<tc>} {
    %c0 = arith.constant 0 : index
    %c0_0 = arith.constant 0 : index
    %0 = vector.load %arg1[%c0, %c0_0] : memref<32x128xf32, #tpu.memory_space<vmem>>, vector<32x128xf32>
    %c0_1 = arith.constant 0 : index
    %c0_2 = arith.constant 0 : index
    %c0_3 = arith.constant 0 : index
    %1 = vector.load %arg0[%c0_1, %c0_2, %c0_3] : memref<1x8x32xf32, #tpu.memory_space<vmem>>, vector<1x8x32xf32>
    %2 = vector.shape_cast %1 : vector<1x8x32xf32> to vector<8x32xf32>
    %cst = arith.constant dense<0.000000e+00> : vector<8x128xf32>
    %3 = tpu.matmul %2, %0, %cst {dimension_numbers = #tpu.dot_dimension_numbers<[1], [0], [0], [1], [0, 0, 1, 1], [], []>} : vector<8x32xf32>, vector<32x128xf32>, vector<8x128xf32> -> vector<8x128xf32>
    %4 = math.tanh %3 : vector<8x128xf32>
    %c0_4 = arith.constant 0 : index
    %c0_5 = arith.constant 0 : index
    %c0_6 = arith.constant 0 : index
    %5 = vector.load %arg2[%c0_4, %c0_5, %c0_6] : memref<1x8x128xf32, #tpu.memory_space<vmem>>, vector<1x8x128xf32>
    %6 = vector.shape_cast %5 : vector<1x8x128xf32> to vector<8x128xf32>
    %7 = vector.shape_cast %4 : vector<8x128xf32> to vector<1x8x128xf32>
    tpu.vector_store %arg2[%c0_4, %c0_5, %c0_6], %7 {strides = array<i32>} : memref<1x8x128xf32, #tpu.memory_space<vmem>>, vector<1x8x128xf32>,
    return
  }
}

</mosaic_0001>

<llo_original>
// kernel: model_forward.1
$region0: #{model_forward.1}
  #allocation0 [shape = 'u32[]', space=smem, size = 0x4, offset = 0x4, fixed_abs, tag = 'smem constant byte address 0x4 - core index']
  #allocation1 [shape = 'u32[144,128]{1,0:T(1,128)}', space=vmem, size = 0x12000, scoped, tag = 'internal scratch']
  %s0 = inlined_call_operand.vmem [shape: f32[1,8,32], index: 0, kind: input, shape index: {}]
  %s1 = inlined_call_operand.hbm [shape: f32[32,128], index: 1, kind: input, shape index: {}]
  %s2 = inlined_call_operand.vmem [shape: f32[1,8,128], index: 2, kind: output, shape index: {}]
  %s3 = sld [smem:[#allocation0]]
  $region22: #{model_forward.1} parent=0
    _
  %s5 = ssub.s32 1, %s3
  %s6 = scalar_select 0, %s5, %s3
  $region1: #{model_forward.1} parent=0
    #allocation2 [shape = 'u8[16384]{0}', space=vmem, size = 0x4000, scoped, tag = 'input window, operand 1, single buffered']
    #allocation3 [shape = 's32[1]{0}', space=sflag, size = 0x4, scoped, tag = 'scoped memory for model_forward.1']
    %7 = vsyncpa [#allocation3], 0
    // Predicated region
    $region2: #{model_forward.1} parent=1 // pred_check
      _
    $region3: #{model_forward.1} parent=1 // pred_check_branch
      %9 = sbr.rel (0) target = $region5
    $region4: #{model_forward.1} parent=1 // pred_region
      _
    $region5: #{model_forward.1} parent=1 // pred_fallthru
      _
    // Predicated region
    $region6: #{model_forward.1} parent=1 // pred_check
      _
    $region7: #{model_forward.1} parent=1 // pred_check_branch
      %11 = sbr.rel (0) target = $region9
    $region8: #{model_forward.1} parent=1 // pred_region
      %s13 = ssub.s32 512, 512
      %14 = vsyncadd [#allocation3], %s13
      %s15 = sshll.u32 [#allocation2], 4
      %s16 = int_to_ptr.vmem [resolvable:$true] %s15
      %21 = dma.hbm_to_vmem [thread:$0]  %s1, 512, %s16, [#allocation3], 128, 128, 8
    $region9: #{model_forward.1} parent=1 // pred_fallthru
      _
    // Predicated region
    $region10: #{model_forward.1} parent=1 // pred_check
      _
    $region11: #{model_forward.1} parent=1 // pred_check_branch
      %23 = sbr.rel (0) target = $region13
    $region12: #{model_forward.1} parent=1 // pred_region
      %24 = dma.done [#allocation3], 512
    $region13: #{model_forward.1} parent=1 // pred_fallthru
      _
    %v25 = vld [vmem:[#allocation2] sm:$0xff]
    %v26 = vld [vmem:[#allocation2 + $0x8] sm:$0xff]
    %v27 = vld [vmem:[#allocation2 + $0x10] sm:$0xff]
    %v28 = vld [vmem:[#allocation2 + $0x18] sm:$0xff]
    %v29 = vld [vmem:[%s0] sm:$0xff]
    %vm30 = vcmask 261120
    %v32 = vsel %vm30, %v29, 0
    %34 = vmatprep.subr.mxu0 0.0
    %35 = vmatpush1.msra.mxu0 %v25
    %36 = vmatprep.subr.mxu0 0.0
    %37 = vmatpush1.msra.mxu0 %v26
    %38 = vmatprep.subr.mxu0 0.0
    %39 = vmatpush1.msra.mxu0 %v27
    %40 = vmatprep.subr.mxu0 0.0
    %41 = vmatpush1.msra.mxu0 %v28
    %42 = vmatprep.subr.mxu0 0.0
    %43 = vmatpush1.msra.mxu0 0.0
    %44 = vmatprep.subr.mxu0 0.0
    %45 = vmatpush1.msra.mxu0 0.0
    %46 = vmatprep.subr.mxu0 0.0
    %47 = vmatpush1.msra.mxu0 0.0
    %48 = vmatprep.subr.mxu0 0.0
    %49 = vmatpush1.msra.mxu0 0.0
    %50 = vmatprep.subr.mxu0 0.0
    %51 = vmatpush1.msra.mxu0 0.0
    %52 = vmatprep.subr.mxu0 0.0
    %53 = vmatpush1.msra.mxu0 0.0
    %54 = vmatprep.subr.mxu0 0.0
    %55 = vmatpush1.msra.mxu0 0.0
    %56 = vmatprep.subr.mxu0 0.0
    %57 = vmatpush1.msra.mxu0 0.0
    %58 = vmatprep.subr.mxu0 0.0
    %59 = vmatpush1.msra.mxu0 0.0
    %60 = vmatprep.subr.mxu0 0.0
    %61 = vmatpush1.msra.mxu0 0.0
    %62 = vmatprep.subr.mxu0 0.0
    %63 = vmatpush1.msra.mxu0 0.0
    %64 = vmatprep.subr.mxu0 0.0
    %65 = vmatpush1.msra.mxu0 0.0
    %66 = vmatprep.subr.mxu0 0.0
    %67 = vmatpush1.msra.mxu0 0.0
    %68 = vmatprep.subr.mxu0 0.0
    %69 = vmatpush1.msra.mxu0 0.0
    %70 = vmatprep.subr.mxu0 0.0
    %71 = vmatpush1.msra.mxu0 0.0
    %72 = vmatprep.subr.mxu0 0.0
    %73 = vmatpush1.msra.mxu0 0.0
    %74 = vmatprep.subr.mxu0 0.0
    %75 = vmatpush1.msra.mxu0 0.0
    %76 = vmatprep.subr.mxu0 0.0
    %77 = vmatpush1.msra.mxu0 0.0
    %78 = vmatprep.subr.mxu0 0.0
    %79 = vmatpush1.msra.mxu0 0.0
    %80 = vmatprep.subr.mxu0 0.0
    %81 = vmatpush1.msra.mxu0 0.0
    %82 = vmatprep.subr.mxu0 0.0
    %83 = vmatpush1.msra.mxu0 0.0
    %84 = vmatprep.subr.mxu0 0.0
    %85 = vmatpush1.msra.mxu0 0.0
    %86 = vmatprep.subr.mxu0 0.0
    %87 = vmatpush1.msra.mxu0 0.0
    %88 = vmatprep.subr.mxu0 0.0
    %89 = vmatpush1.msra.mxu0 0.0
    %90 = vmatprep.subr.mxu0 0.0
    %91 = vmatpush1.msra.mxu0 0.0
    %92 = vmatprep.subr.mxu0 0.0
    %93 = vmatpush1.msra.mxu0 0.0
    %94 = vmatprep.subr.mxu0 0.0
    %95 = vmatpush1.msra.mxu0 0.0
    %96 = vmatprep.subr.mxu0 0.0
    %97 = vmatpush1.msra.mxu0 0.0
    %98 = vmatprep.mubr.f32.mxu0 0.0
    %99 = vmatmul.mubr.f32.gmra.mrb[0].mxu0 %v32
    %v100 = vpop.f32.mrb[0].mxu0
    %v101 = vadd.f32 0.0, %v100
    %v102 = vpop.f32.mrb[0].mxu0
    %103 = vdwg.mxu0
    %v104 = vtanh.pop %v101
    %105 = vst [vmem:[%s2] sm:$0xff] %v104
    // Predicated region
    $region14: #{model_forward.1} parent=1 // pred_check
      _
    $region15: #{model_forward.1} parent=1 // pred_check_branch
      %107 = sbr.rel (0) target = $region17
    $region16: #{model_forward.1} parent=1 // pred_region
      _
    $region17: #{model_forward.1} parent=1 // pred_fallthru
      _
    // Predicated region
    $region18: #{model_forward.1} parent=1 // pred_check
      _
    $region19: #{model_forward.1} parent=1 // pred_check_branch
      %109 = sbr.rel (0) target = $region21
    $region20: #{model_forward.1} parent=1 // pred_region
      _
    $region21: #{model_forward.1} parent=1 // pred_fallthru
      _
    %110 = vsyncpa [#allocation3], 1

</llo_original>
